<compile_context>
chip_gen: v7x
topology: tpu7x:2x2x1
jax: 0.10.0
libtpu: 0.0.40
codegen_flags: <defaults>
</compile_context>

<pallas_src>
import jax
import jax.numpy as jnp
from jax import lax
from jax.experimental import pallas as pl
from jax.experimental.pallas import tpu as pltpu


_PARAM_KEYS = ("w0", "b0", "g1", "be1", "w1", "b1", "g2", "be2", "wz", "bz", "ez")


def _flat(p):
    return [p[k] for k in _PARAM_KEYS]


# ----------------------------------------------------------------------------
# One-time parameter preprocessing (runs OUTSIDE the jitted step)
# ----------------------------------------------------------------------------
def prepare_coupling_params(p, ndim, *, fold_flip):
    """Preprocess one AffineCoupling's parameters for the fused kernel.

    fold_flip=True additionally folds the Flow's surrounding column flips into
    this coupling's weights:
      - rows of the first Linear weight are reversed (input-side flip),
      - the ZeroFC head's output columns are reversed within each half
        (output-side flip of both log_s and t).
    """
    half = ndim // 2
    f32 = jnp.float32
    r2 = lambda v: jnp.reshape(jnp.asarray(v, f32), (1, -1))

    w0 = jnp.asarray(p["w0"], f32).T            # (half, hidden)
    w1 = jnp.asarray(p["w1"], f32).T            # (hidden, hidden)
    wz = jnp.asarray(p["wz"], f32).T            # (hidden, 2*half): [log_s | t] columns
    bz = jnp.asarray(p["bz"], f32)              # (2*half,)
    ez = jnp.exp(3.0 * jnp.asarray(p["sz"], f32))

    if fold_flip:
        w0 = w0[::-1, :]

        def rev_halves(a):
            return jnp.concatenate(
                [a[..., :half][..., ::-1], a[..., half:][..., ::-1]], axis=-1)

        wz, bz, ez = rev_halves(wz), rev_halves(bz), rev_halves(ez)

    return dict(w0=w0, b0=r2(p["b0"]), g1=r2(p["g1"]), be1=r2(p["be1"]),
                w1=w1, b1=r2(p["b1"]), g2=r2(p["g2"]), be2=r2(p["be2"]),
                wz=wz, bz=r2(bz), ez=r2(ez))


# ----------------------------------------------------------------------------
# Fused Flow kernel: ActNorm1 + Coupling1 + flip + ActNorm2 + Coupling2 + flip
# ----------------------------------------------------------------------------
def _flow_kernel(sc_ref, x_ref,
                 w0a, b0a, g1a, be1a, w1a, b1a, g2a, be2a, wza, bza, eza,
                 w0b, b0b, g1b, be1b, w1b, b1b, g2b, be2b, wzb, bzb, ezb,
                 out_ref, logdet_ref):
    f32 = jnp.float32
    half = x_ref.shape[1] // 2

    loc1, scale1 = sc_ref[0], sc_ref[1]
    loc2, scale2 = sc_ref[2], sc_ref[3]

    x = x_ref[...].astype(f32)
    y = (x + loc1) * scale1                       # ActNorm 1 (fused)
    in_a = y[:, :half]
    in_b = y[:, half:]

    def coupling_net(a, w0, b0, g1, be1, w1, b1, g2, be2, wz, bz, ez):
        # Linear -> LeakyReLU(0.01) -> BatchNorm1d(eps=0.01, training-mode stats)
        h = jnp.dot(a, w0[...], preferred_element_type=f32) + b0[...]
        h = jnp.where(h > 0, h, 0.01 * h)
        mu = jnp.mean(h, axis=0, keepdims=True)
        var = jnp.mean((h - mu) ** 2, axis=0, keepdims=True)
        h = (h - mu) * lax.rsqrt(var + 0.01) * g1[...] + be1[...]

        h = jnp.dot(h, w1[...], preferred_element_type=f32) + b1[...]
        h = jnp.where(h > 0, h, 0.01 * h)
        mu = jnp.mean(h, axis=0, keepdims=True)
        var = jnp.mean((h - mu) ** 2, axis=0, keepdims=True)
        h = (h - mu) * lax.rsqrt(var + 0.01) * g2[...] + be2[...]

        # Merged ZeroFC head: single (hidden, 2*half) matmul, static split.
        z = (jnp.dot(h, wz[...], preferred_element_type=f32) + bz[...]) * ez[...]
        return jnp.tanh(z[:, :half]), z[:, half:]          # (log_s, t)

    # ---- coupling 1 ----
    log_s1, t1 = coupling_net(in_a, w0a, b0a, g1a, be1a, w1a, b1a, g2a, be2a,
                              wza, bza, eza)
    out_b = (in_b + t1) * jnp.exp(log_s1)

    # ---- flip -> ActNorm2 -> coupling 2 -> flip (flips folded into params) ----
    v = (out_b + loc2) * scale2                   # == final out[:, half:]
    u = (in_a + loc2) * scale2
    log_s2, t2 = coupling_net(v, w0b, b0b, g1b, be1b, w1b, b1b, g2b, be2b,
                              wzb, bzb, ezb)
    out_left = (u + t2) * jnp.exp(log_s2)         # == final out[:, :half]

    out_ref[:, :half] = out_left.astype(out_ref.dtype)
    out_ref[:, half:] = v.astype(out_ref.dtype)
    logdet_ref[...] = (jnp.sum(log_s1, axis=1, keepdims=True)
                       + jnp.sum(log_s2, axis=1, keepdims=True))


# ----------------------------------------------------------------------------
# Pure-JAX replica of one coupling on *prepped* params (used only for the
# one-time data-dependent ActNorm-2 initialization path).
# ----------------------------------------------------------------------------
def _coupling_fwd_jax(y, p, half):
    in_a = y[:, :half]
    in_b = y[:, half:]
    h = in_a @ p["w0"] + p["b0"]
    h = jnp.where(h > 0, h, 0.01 * h)
    mu = jnp.mean(h, 0, keepdims=True)
    var = jnp.mean((h - mu) ** 2, 0, keepdims=True)
    h = (h - mu) / jnp.sqrt(var + 0.01) * p["g1"] + p["be1"]
    h = h @ p["w1"] + p["b1"]
    h = jnp.where(h > 0, h, 0.01 * h)
    mu = jnp.mean(h, 0, keepdims=True)
    var = jnp.mean((h - mu) ** 2, 0, keepdims=True)
    h = (h - mu) / jnp.sqrt(var + 0.01) * p["g2"] + p["be2"]
    z = (h @ p["wz"] + p["bz"]) * p["ez"]
    log_s = jnp.tanh(z[:, :half])
    t = z[:, half:]
    out_b = (in_b + t) * jnp.exp(log_s)
    return jnp.concatenate([in_a, out_b], axis=1)


# ----------------------------------------------------------------------------
# Flow forward (wrapper)
# ----------------------------------------------------------------------------
def flow_forward(x, an, cp1p, cp2p):
    """Flow.forward.  an: ActNorm state dict; cp*p: PREPPED coupling params.

    Returns (out, logdet, new_actnorm_state).
    """
    B, ndim = x.shape
    half = ndim // 2
    x32 = x.astype(jnp.float32)
    n = x32.size

    def stats(a):
        mean = jnp.sum(a) / n
        var = jnp.sum((a - mean) ** 2) / (n - 1)       # torch.std(): unbiased
        return -mean, jnp.log(jnp.sqrt(var) + 1e-6)

    # ActNorm-1 one-time data-dependent init (hoisted out of the kernel).
    loc1, lsi1 = lax.cond(
        an["init1"][0] == 0,
        lambda: stats(x32),
        lambda: (an["loc1"][0].astype(jnp.float32),
                 an["lsi1"][0].astype(jnp.float32)))
    scale1 = jnp.exp(-lsi1)

    # ActNorm-2 init needs the coupling-1 output; its stats are flip-invariant,
    # so compute them with the pure-JAX replica (runs once over the lifetime).
    def init2(l1, s1):
        y1 = _coupling_fwd_jax((x32 + l1) * s1, cp1p, half)
        return stats(y1)

    loc2, lsi2 = lax.cond(
        an["init2"][0] == 0,
        init2,
        lambda l1, s1: (an["loc2"][0].astype(jnp.float32),
                        an["lsi2"][0].astype(jnp.float32)),
        loc1, scale1)
    scale2 = jnp.exp(-lsi2)

    scalars = jnp.stack([loc1, scale1, loc2, scale2]).astype(jnp.float32)

    n_arrays = 1 + 2 * len(_PARAM_KEYS)                # x + both param sets
    out, logdet_cpl = pl.pallas_call(
        _flow_kernel,
        out_shape=(jax.ShapeDtypeStruct((B, ndim), x.dtype),
                   jax.ShapeDtypeStruct((B, 1), jnp.float32)),
        in_specs=([pl.BlockSpec(memory_space=pltpu.MemorySpace.SMEM)]
                  + [pl.BlockSpec(memory_space=pltpu.MemorySpace.VMEM)] * n_arrays),
    )(scalars, x, *_flat(cp1p), *_flat(cp2p))

    logdet = ndim * (-lsi1) + ndim * (-lsi2) + logdet_cpl[:, 0]

    new_an = dict(loc1=jnp.reshape(loc1, (1,)), lsi1=jnp.reshape(lsi1, (1,)),
                  init1=jnp.ones((1,), jnp.int32),
                  loc2=jnp.reshape(loc2, (1,)), lsi2=jnp.reshape(lsi2, (1,)),
                  init2=jnp.ones((1,), jnp.int32))
    return out, logdet, new_an


# ----------------------------------------------------------------------------
# Pure-JAX reference (raw PyTorch-layout params) for correctness checking
# ----------------------------------------------------------------------------
def _actnorm_ref(x, loc, lsi, initialized):
    x32 = x.astype(jnp.float32)
    n = x32.size
    mean = jnp.sum(x32) / n
    var = jnp.sum((x32 - mean) ** 2) / (n - 1)
    std = jnp.sqrt(var)
    is_init = initialized[0] != 0
    loc_v = jnp.where(is_init, loc[0], -mean)
    lsi_v = jnp.where(is_init, lsi[0], jnp.log(std + 1e-6))
    out = ((x32 + loc_v) * jnp.exp(-lsi_v)).astype(x.dtype)
    logdet = x.shape[1] * (-lsi_v)
    return (out, logdet, jnp.reshape(loc_v, (1,)), jnp.reshape(lsi_v, (1,)),
            jnp.ones((1,), jnp.int32))


def _coupling_ref(x, p):
    B, ndim = x.shape
    half = ndim // 2
    in_a = x[:, :half].astype(jnp.float32)
    in_b = x[:, half:].astype(jnp.float32)

    h = in_a @ p["w0"].T + p["b0"]
    h = jnp.where(h > 0, h, 0.01 * h)
    mu = jnp.mean(h, axis=0, keepdims=True)
    var = jnp.mean((h - mu) ** 2, axis=0, keepdims=True)
    h = (h - mu) / jnp.sqrt(var + 0.01) * p["g1"] + p["be1"]

    h = h @ p["w1"].T + p["b1"]
    h = jnp.where(h > 0, h, 0.01 * h)
    mu = jnp.mean(h, axis=0, keepdims=True)
    var = jnp.mean((h - mu) ** 2, axis=0, keepdims=True)
    h = (h - mu) / jnp.sqrt(var + 0.01) * p["g2"] + p["be2"]

    z = (h @ p["wz"].T + p["bz"]) * jnp.exp(3.0 * p["sz"])
    log_s = jnp.tanh(z[:, :half])
    t = z[:, half:]
    out_b = (in_b + t) * jnp.exp(log_s)
    out = jnp.concatenate([in_a, out_b], axis=1).astype(x.dtype)
    return out, jnp.sum(log_s, axis=1)


def flow_reference(x, an, cp1, cp2):
    out, det1, loc1, lsi1, init1 = _actnorm_ref(x, an["loc1"], an["lsi1"], an["init1"])
    out, det2 = _coupling_ref(out, cp1)
    out = out[:, ::-1]
    out, det3, loc2, lsi2, init2 = _actnorm_ref(out, an["loc2"], an["lsi2"], an["init2"])
    out, det4 = _coupling_ref(out, cp2)
    out = out[:, ::-1]
    logdet = det1 + det2 + det3 + det4
    new_an = dict(loc1=loc1, lsi1=lsi1, init1=init1,
                  loc2=loc2, lsi2=lsi2, init2=init2)
    return out, logdet, new_an


# ----------------------------------------------------------------------------
if __name__ == "__main__":
    key = jax.random.PRNGKey(0)
    B, ndim, seqfrac = 8, 32, 4
    half = ndim // 2                    # 16
    hidden = ndim // (2 * seqfrac)      # 4
    keys = jax.random.split(key, 12)

    x = jax.random.normal(keys[0], (B, ndim), jnp.float32) * 1.5 + 0.3

    def make_coupling_params(ks):
        # PyTorch init: Linear weights ~ N(0, 0.05), biases 0, BN gamma=1 beta=0,
        # ZeroFC weight/bias/scale = 0.  We use small NONZERO ZeroFC values here
        # so the tanh/exp affine path of the kernel is actually exercised.
        return dict(
            w0=0.05 * jax.random.normal(ks[0], (hidden, half), jnp.float32),
            b0=jnp.zeros((hidden,), jnp.float32),
            g1=jnp.ones((hidden,), jnp.float32),
            be1=jnp.zeros((hidden,), jnp.float32),
            w1=0.05 * jax.random.normal(ks[1], (hidden, hidden), jnp.float32),
            b1=jnp.zeros((hidden,), jnp.float32),
            g2=jnp.ones((hidden,), jnp.float32),
            be2=jnp.zeros((hidden,), jnp.float32),
            wz=0.10 * jax.random.normal(ks[2], (ndim, hidden), jnp.float32),
            bz=0.05 * jax.random.normal(ks[3], (ndim,), jnp.float32),
            sz=0.05 * jax.random.normal(ks[4], (ndim,), jnp.float32),
        )

    cp1_raw = make_coupling_params(keys[1:6])
    cp2_raw = make_coupling_params(keys[6:11])

    # One-time parameter preprocessing (transposes, exp(3*scale), flip folding)
    # hoisted OUT of the jitted step.
    cp1p = prepare_coupling_params(cp1_raw, ndim, fold_flip=False)
    cp2p = prepare_coupling_params(cp2_raw, ndim, fold_flip=True)

    an = dict(loc1=jnp.zeros((1,), jnp.float32), lsi1=jnp.zeros((1,), jnp.float32),
              init1=jnp.zeros((1,), jnp.int32),
              loc2=jnp.zeros((1,), jnp.float32), lsi2=jnp.zeros((1,), jnp.float32),
              init2=jnp.zeros((1,), jnp.int32))

    flow_fn = jax.jit(flow_forward)

    # First call: ActNorm layers data-dependently initialize.
    out, logdet, new_an = flow_fn(x, an, cp1p, cp2p)
    jax.block_until_ready((out, logdet))

    ref_out, ref_logdet, ref_an = flow_reference(x, an, cp1_raw, cp2_raw)
    assert jnp.allclose(out, ref_out, atol=2e-4, rtol=2e-4), "out mismatch (init call)"
    assert jnp.allclose(logdet, ref_logdet, atol=2e-4, rtol=2e-4), "logdet mismatch (init call)"

    # Second call: ActNorm parameters are now fixed (initialized == 1).
    out2, logdet2, _ = flow_fn(x, new_an, cp1p, cp2p)
    jax.block_until_ready((out2, logdet2))
    ref_out2, ref_logdet2, _ = flow_reference(x, ref_an, cp1_raw, cp2_raw)
    assert jnp.allclose(out2, ref_out2, atol=2e-4, rtol=2e-4), "out mismatch (steady state)"
    assert jnp.allclose(logdet2, ref_logdet2, atol=2e-4, rtol=2e-4), "logdet mismatch (steady state)"
    assert jnp.allclose(out2, out, atol=1e-5, rtol=1e-5), "init vs steady-state inconsistency"

    print("KERNEL_OK")
</pallas_src>

<mosaic_0001>
module attributes {stable_mosaic.version = 11 : i64} {
  func.func @_flow_kernel(%arg0: memref<4xf32, #tpu.memory_space<smem>>, %arg1: memref<8x32xf32, #tpu.memory_space<vmem>>, %arg2: memref<16x4xf32, #tpu.memory_space<vmem>>, %arg3: memref<1x4xf32, #tpu.memory_space<vmem>>, %arg4: memref<1x4xf32, #tpu.memory_space<vmem>>, %arg5: memref<1x4xf32, #tpu.memory_space<vmem>>, %arg6: memref<4x4xf32, #tpu.memory_space<vmem>>, %arg7: memref<1x4xf32, #tpu.memory_space<vmem>>, %arg8: memref<1x4xf32, #tpu.memory_space<vmem>>, %arg9: memref<1x4xf32, #tpu.memory_space<vmem>>, %arg10: memref<4x32xf32, #tpu.memory_space<vmem>>, %arg11: memref<1x32xf32, #tpu.memory_space<vmem>>, %arg12: memref<1x32xf32, #tpu.memory_space<vmem>>, %arg13: memref<16x4xf32, #tpu.memory_space<vmem>>, %arg14: memref<1x4xf32, #tpu.memory_space<vmem>>, %arg15: memref<1x4xf32, #tpu.memory_space<vmem>>, %arg16: memref<1x4xf32, #tpu.memory_space<vmem>>, %arg17: memref<4x4xf32, #tpu.memory_space<vmem>>, %arg18: memref<1x4xf32, #tpu.memory_space<vmem>>, %arg19: memref<1x4xf32, #tpu.memory_space<vmem>>, %arg20: memref<1x4xf32, #tpu.memory_space<vmem>>, %arg21: memref<4x32xf32, #tpu.memory_space<vmem>>, %arg22: memref<1x32xf32, #tpu.memory_space<vmem>>, %arg23: memref<1x32xf32, #tpu.memory_space<vmem>>, %arg24: memref<8x32xf32, #tpu.memory_space<vmem>>, %arg25: memref<8x1xf32, #tpu.memory_space<vmem>>) attributes {dimension_semantics = [], scalar_prefetch = 0 : i64, scratch_operands = 0 : i64, tpu.core_type = #tpu.core_type<tc>} {
    %c0 = arith.constant 0 : index
    %0 = memref.load %arg0[%c0] : memref<4xf32, #tpu.memory_space<smem>>
    %c1 = arith.constant 1 : index
    %1 = memref.load %arg0[%c1] : memref<4xf32, #tpu.memory_space<smem>>
    %c2 = arith.constant 2 : index
    %2 = memref.load %arg0[%c2] : memref<4xf32, #tpu.memory_space<smem>>
    %c3 = arith.constant 3 : index
    %3 = memref.load %arg0[%c3] : memref<4xf32, #tpu.memory_space<smem>>
    %c0_0 = arith.constant 0 : index
    %c0_1 = arith.constant 0 : index
    %4 = vector.load %arg1[%c0_0, %c0_1] : memref<8x32xf32, #tpu.memory_space<vmem>>, vector<8x32xf32>
    %5 = vector.broadcast %0 : f32 to vector<8x32xf32>
    %6 = arith.addf %4, %5 : vector<8x32xf32>
    %7 = vector.broadcast %1 : f32 to vector<8x32xf32>
    %8 = arith.mulf %6, %7 : vector<8x32xf32>
    %9 = vector.extract_strided_slice %8 {offsets = [0, 0], sizes = [8, 16], strides = [1, 1]} : vector<8x32xf32> to vector<8x16xf32>
    %10 = vector.extract_strided_slice %8 {offsets = [0, 16], sizes = [8, 16], strides = [1, 1]} : vector<8x32xf32> to vector<8x16xf32>
    %c0_2 = arith.constant 0 : index
    %c0_3 = arith.constant 0 : index
    %11 = vector.load %arg2[%c0_2, %c0_3] : memref<16x4xf32, #tpu.memory_space<vmem>>, vector<16x4xf32>
    %cst = arith.constant dense<0.000000e+00> : vector<8x4xf32>
    %12 = tpu.matmul %9, %11, %cst {dimension_numbers = #tpu.dot_dimension_numbers<[1], [0], [0], [1], [0, 0, 1, 1], [], []>} : vector<8x16xf32>, vector<16x4xf32>, vector<8x4xf32> -> vector<8x4xf32>
    %c0_4 = arith.constant 0 : index
    %c0_5 = arith.constant 0 : index
    %13 = vector.load %arg3[%c0_4, %c0_5] : memref<1x4xf32, #tpu.memory_space<vmem>>, vector<1x4xf32>
    %14 = vector.broadcast %13 : vector<1x4xf32> to vector<8x4xf32>
    %15 = arith.addf %12, %14 : vector<8x4xf32>
    %cst_6 = arith.constant 0.000000e+00 : f32
    %16 = vector.broadcast %cst_6 : f32 to vector<8x4xf32>
    %17 = arith.cmpf ogt, %15, %16 : vector<8x4xf32>
    %cst_7 = arith.constant 0.00999999977 : f32
    %18 = vector.broadcast %cst_7 : f32 to vector<8x4xf32>
    %19 = arith.mulf %18, %15 : vector<8x4xf32>
    %20 = arith.select %17, %15, %19 : vector<8x4xi1>, vector<8x4xf32>
    %cst_8 = arith.constant dense<0.000000e+00> : vector<4xf32>
    %21 = vector.multi_reduction <add>, %20, %cst_8 [0] : vector<8x4xf32> to vector<4xf32>
    %22 = vector.shape_cast %21 : vector<4xf32> to vector<1x4xf32>
    %cst_9 = arith.constant 8.000000e+00 : f32
    %23 = vector.broadcast %cst_9 : f32 to vector<1x4xf32>
    %24 = arith.divf %22, %23 : vector<1x4xf32>
    %25 = vector.broadcast %24 : vector<1x4xf32> to vector<8x4xf32>
    %26 = arith.subf %20, %25 : vector<8x4xf32>
    %27 = arith.mulf %26, %26 : vector<8x4xf32>
    %cst_10 = arith.constant dense<0.000000e+00> : vector<4xf32>
    %28 = vector.multi_reduction <add>, %27, %cst_10 [0] : vector<8x4xf32> to vector<4xf32>
    %29 = vector.shape_cast %28 : vector<4xf32> to vector<1x4xf32>
    %cst_11 = arith.constant 8.000000e+00 : f32
    %30 = vector.broadcast %cst_11 : f32 to vector<1x4xf32>
    %31 = arith.divf %29, %30 : vector<1x4xf32>
    %32 = vector.broadcast %24 : vector<1x4xf32> to vector<8x4xf32>
    %33 = arith.subf %20, %32 : vector<8x4xf32>
    %cst_12 = arith.constant 0.00999999977 : f32
    %34 = vector.broadcast %cst_12 : f32 to vector<1x4xf32>
    %35 = arith.addf %31, %34 : vector<1x4xf32>
    %36 = math.rsqrt %35 : vector<1x4xf32>
    %37 = vector.broadcast %36 : vector<1x4xf32> to vector<8x4xf32>
    %38 = arith.mulf %33, %37 : vector<8x4xf32>
    %c0_13 = arith.constant 0 : index
    %c0_14 = arith.constant 0 : index
    %39 = vector.load %arg4[%c0_13, %c0_14] : memref<1x4xf32, #tpu.memory_space<vmem>>, vector<1x4xf32>
    %40 = vector.broadcast %39 : vector<1x4xf32> to vector<8x4xf32>
    %41 = arith.mulf %38, %40 : vector<8x4xf32>
    %c0_15 = arith.constant 0 : index
    %c0_16 = arith.constant 0 : index
    %42 = vector.load %arg5[%c0_15, %c0_16] : memref<1x4xf32, #tpu.memory_space<vmem>>, vector<1x4xf32>
    %43 = vector.broadcast %42 : vector<1x4xf32> to vector<8x4xf32>
    %44 = arith.addf %41, %43 : vector<8x4xf32>
    %c0_17 = arith.constant 0 : index
    %c0_18 = arith.constant 0 : index
    %45 = vector.load %arg6[%c0_17, %c0_18] : memref<4x4xf32, #tpu.memory_space<vmem>>, vector<4x4xf32>
    %cst_19 = arith.constant dense<0.000000e+00> : vector<8x4xf32>
    %46 = tpu.matmul %44, %45, %cst_19 {dimension_numbers = #tpu.dot_dimension_numbers<[1], [0], [0], [1], [0, 0, 1, 1], [], []>} : vector<8x4xf32>, vector<4x4xf32>, vector<8x4xf32> -> vector<8x4xf32>
    %c0_20 = arith.constant 0 : index
    %c0_21 = arith.constant 0 : index
    %47 = vector.load %arg7[%c0_20, %c0_21] : memref<1x4xf32, #tpu.memory_space<vmem>>, vector<1x4xf32>
    %48 = vector.broadcast %47 : vector<1x4xf32> to vector<8x4xf32>
    %49 = arith.addf %46, %48 : vector<8x4xf32>
    %cst_22 = arith.constant 0.000000e+00 : f32
    %50 = vector.broadcast %cst_22 : f32 to vector<8x4xf32>
    %51 = arith.cmpf ogt, %49, %50 : vector<8x4xf32>
    %cst_23 = arith.constant 0.00999999977 : f32
    %52 = vector.broadcast %cst_23 : f32 to vector<8x4xf32>
    %53 = arith.mulf %52, %49 : vector<8x4xf32>
    %54 = arith.select %51, %49, %53 : vector<8x4xi1>, vector<8x4xf32>
    %cst_24 = arith.constant dense<0.000000e+00> : vector<4xf32>
    %55 = vector.multi_reduction <add>, %54, %cst_24 [0] : vector<8x4xf32> to vector<4xf32>
    %56 = vector.shape_cast %55 : vector<4xf32> to vector<1x4xf32>
    %cst_25 = arith.constant 8.000000e+00 : f32
    %57 = vector.broadcast %cst_25 : f32 to vector<1x4xf32>
    %58 = arith.divf %56, %57 : vector<1x4xf32>
    %59 = vector.broadcast %58 : vector<1x4xf32> to vector<8x4xf32>
    %60 = arith.subf %54, %59 : vector<8x4xf32>
    %61 = arith.mulf %60, %60 : vector<8x4xf32>
    %cst_26 = arith.constant dense<0.000000e+00> : vector<4xf32>
    %62 = vector.multi_reduction <add>, %61, %cst_26 [0] : vector<8x4xf32> to vector<4xf32>
    %63 = vector.shape_cast %62 : vector<4xf32> to vector<1x4xf32>
    %cst_27 = arith.constant 8.000000e+00 : f32
    %64 = vector.broadcast %cst_27 : f32 to vector<1x4xf32>
    %65 = arith.divf %63, %64 : vector<1x4xf32>
    %66 = vector.broadcast %58 : vector<1x4xf32> to vector<8x4xf32>
    %67 = arith.subf %54, %66 : vector<8x4xf32>
    %cst_28 = arith.constant 0.00999999977 : f32
    %68 = vector.broadcast %cst_28 : f32 to vector<1x4xf32>
    %69 = arith.addf %65, %68 : vector<1x4xf32>
    %70 = math.rsqrt %69 : vector<1x4xf32>
    %71 = vector.broadcast %70 : vector<1x4xf32> to vector<8x4xf32>
    %72 = arith.mulf %67, %71 : vector<8x4xf32>
    %c0_29 = arith.constant 0 : index
    %c0_30 = arith.constant 0 : index
    %73 = vector.load %arg8[%c0_29, %c0_30] : memref<1x4xf32, #tpu.memory_space<vmem>>, vector<1x4xf32>
    %74 = vector.broadcast %73 : vector<1x4xf32> to vector<8x4xf32>
    %75 = arith.mulf %72, %74 : vector<8x4xf32>
    %c0_31 = arith.constant 0 : index
    %c0_32 = arith.constant 0 : index
    %76 = vector.load %arg9[%c0_31, %c0_32] : memref<1x4xf32, #tpu.memory_space<vmem>>, vector<1x4xf32>
    %77 = vector.broadcast %76 : vector<1x4xf32> to vector<8x4xf32>
    %78 = arith.addf %75, %77 : vector<8x4xf32>
    %c0_33 = arith.constant 0 : index
    %c0_34 = arith.constant 0 : index
    %79 = vector.load %arg10[%c0_33, %c0_34] : memref<4x32xf32, #tpu.memory_space<vmem>>, vector<4x32xf32>
    %cst_35 = arith.constant dense<0.000000e+00> : vector<8x32xf32>
    %80 = tpu.matmul %78, %79, %cst_35 {dimension_numbers = #tpu.dot_dimension_numbers<[1], [0], [0], [1], [0, 0, 1, 1], [], []>} : vector<8x4xf32>, vector<4x32xf32>, vector<8x32xf32> -> vector<8x32xf32>
    %c0_36 = arith.constant 0 : index
    %c0_37 = arith.constant 0 : index
    %81 = vector.load %arg11[%c0_36, %c0_37] : memref<1x32xf32, #tpu.memory_space<vmem>>, vector<1x32xf32>
    %82 = vector.broadcast %81 : vector<1x32xf32> to vector<8x32xf32>
    %83 = arith.addf %80, %82 : vector<8x32xf32>
    %c0_38 = arith.constant 0 : index
    %c0_39 = arith.constant 0 : index
    %84 = vector.load %arg12[%c0_38, %c0_39] : memref<1x32xf32, #tpu.memory_space<vmem>>, vector<1x32xf32>
    %85 = vector.broadcast %84 : vector<1x32xf32> to vector<8x32xf32>
    %86 = arith.mulf %83, %85 : vector<8x32xf32>
    %87 = vector.extract_strided_slice %86 {offsets = [0, 0], sizes = [8, 16], strides = [1, 1]} : vector<8x32xf32> to vector<8x16xf32>
    %88 = math.tanh %87 : vector<8x16xf32>
    %89 = vector.extract_strided_slice %86 {offsets = [0, 16], sizes = [8, 16], strides = [1, 1]} : vector<8x32xf32> to vector<8x16xf32>
    %90 = arith.addf %10, %89 : vector<8x16xf32>
    %91 = math.exp %88 : vector<8x16xf32>
    %92 = arith.mulf %90, %91 : vector<8x16xf32>
    %93 = vector.broadcast %2 : f32 to vector<8x16xf32>
    %94 = arith.addf %92, %93 : vector<8x16xf32>
    %95 = vector.broadcast %3 : f32 to vector<8x16xf32>
    %96 = arith.mulf %94, %95 : vector<8x16xf32>
    %97 = vector.broadcast %2 : f32 to vector<8x16xf32>
    %98 = arith.addf %9, %97 : vector<8x16xf32>
    %99 = vector.broadcast %3 : f32 to vector<8x16xf32>
    %100 = arith.mulf %98, %99 : vector<8x16xf32>
    %c0_40 = arith.constant 0 : index
    %c0_41 = arith.constant 0 : index
    %101 = vector.load %arg13[%c0_40, %c0_41] : memref<16x4xf32, #tpu.memory_space<vmem>>, vector<16x4xf32>
    %cst_42 = arith.constant dense<0.000000e+00> : vector<8x4xf32>
    %102 = tpu.matmul %96, %101, %cst_42 {dimension_numbers = #tpu.dot_dimension_numbers<[1], [0], [0], [1], [0, 0, 1, 1], [], []>} : vector<8x16xf32>, vector<16x4xf32>, vector<8x4xf32> -> vector<8x4xf32>
    %c0_43 = arith.constant 0 : index
    %c0_44 = arith.constant 0 : index
    %103 = vector.load %arg14[%c0_43, %c0_44] : memref<1x4xf32, #tpu.memory_space<vmem>>, vector<1x4xf32>
    %104 = vector.broadcast %103 : vector<1x4xf32> to vector<8x4xf32>
    %105 = arith.addf %102, %104 : vector<8x4xf32>
    %cst_45 = arith.constant 0.000000e+00 : f32
    %106 = vector.broadcast %cst_45 : f32 to vector<8x4xf32>
    %107 = arith.cmpf ogt, %105, %106 : vector<8x4xf32>
    %cst_46 = arith.constant 0.00999999977 : f32
    %108 = vector.broadcast %cst_46 : f32 to vector<8x4xf32>
    %109 = arith.mulf %108, %105 : vector<8x4xf32>
    %110 = arith.select %107, %105, %109 : vector<8x4xi1>, vector<8x4xf32>
    %cst_47 = arith.constant dense<0.000000e+00> : vector<4xf32>
    %111 = vector.multi_reduction <add>, %110, %cst_47 [0] : vector<8x4xf32> to vector<4xf32>
    %112 = vector.shape_cast %111 : vector<4xf32> to vector<1x4xf32>
    %cst_48 = arith.constant 8.000000e+00 : f32
    %113 = vector.broadcast %cst_48 : f32 to vector<1x4xf32>
    %114 = arith.divf %112, %113 : vector<1x4xf32>
    %115 = vector.broadcast %114 : vector<1x4xf32> to vector<8x4xf32>
    %116 = arith.subf %110, %115 : vector<8x4xf32>
    %117 = arith.mulf %116, %116 : vector<8x4xf32>
    %cst_49 = arith.constant dense<0.000000e+00> : vector<4xf32>
    %118 = vector.multi_reduction <add>, %117, %cst_49 [0] : vector<8x4xf32> to vector<4xf32>
    %119 = vector.shape_cast %118 : vector<4xf32> to vector<1x4xf32>
    %cst_50 = arith.constant 8.000000e+00 : f32
    %120 = vector.broadcast %cst_50 : f32 to vector<1x4xf32>
    %121 = arith.divf %119, %120 : vector<1x4xf32>
    %122 = vector.broadcast %114 : vector<1x4xf32> to vector<8x4xf32>
    %123 = arith.subf %110, %122 : vector<8x4xf32>
    %cst_51 = arith.constant 0.00999999977 : f32
    %124 = vector.broadcast %cst_51 : f32 to vector<1x4xf32>
    %125 = arith.addf %121, %124 : vector<1x4xf32>
    %126 = math.rsqrt %125 : vector<1x4xf32>
    %127 = vector.broadcast %126 : vector<1x4xf32> to vector<8x4xf32>
    %128 = arith.mulf %123, %127 : vector<8x4xf32>
    %c0_52 = arith.constant 0 : index
    %c0_53 = arith.constant 0 : index
    %129 = vector.load %arg15[%c0_52, %c0_53] : memref<1x4xf32, #tpu.memory_space<vmem>>, vector<1x4xf32>
    %130 = vector.broadcast %129 : vector<1x4xf32> to vector<8x4xf32>
    %131 = arith.mulf %128, %130 : vector<8x4xf32>
    %c0_54 = arith.constant 0 : index
    %c0_55 = arith.constant 0 : index
    %132 = vector.load %arg16[%c0_54, %c0_55] : memref<1x4xf32, #tpu.memory_space<vmem>>, vector<1x4xf32>
    %133 = vector.broadcast %132 : vector<1x4xf32> to vector<8x4xf32>
    %134 = arith.addf %131, %133 : vector<8x4xf32>
    %c0_56 = arith.constant 0 : index
    %c0_57 = arith.constant 0 : index
    %135 = vector.load %arg17[%c0_56, %c0_57] : memref<4x4xf32, #tpu.memory_space<vmem>>, vector<4x4xf32>
    %cst_58 = arith.constant dense<0.000000e+00> : vector<8x4xf32>
    %136 = tpu.matmul %134, %135, %cst_58 {dimension_numbers = #tpu.dot_dimension_numbers<[1], [0], [0], [1], [0, 0, 1, 1], [], []>} : vector<8x4xf32>, vector<4x4xf32>, vector<8x4xf32> -> vector<8x4xf32>
    %c0_59 = arith.constant 0 : index
    %c0_60 = arith.constant 0 : index
    %137 = vector.load %arg18[%c0_59, %c0_60] : memref<1x4xf32, #tpu.memory_space<vmem>>, vector<1x4xf32>
    %138 = vector.broadcast %137 : vector<1x4xf32> to vector<8x4xf32>
    %139 = arith.addf %136, %138 : vector<8x4xf32>
    %cst_61 = arith.constant 0.000000e+00 : f32
    %140 = vector.broadcast %cst_61 : f32 to vector<8x4xf32>
    %141 = arith.cmpf ogt, %139, %140 : vector<8x4xf32>
    %cst_62 = arith.constant 0.00999999977 : f32
    %142 = vector.broadcast %cst_62 : f32 to vector<8x4xf32>
    %143 = arith.mulf %142, %139 : vector<8x4xf32>
    %144 = arith.select %141, %139, %143 : vector<8x4xi1>, vector<8x4xf32>
    %cst_63 = arith.constant dense<0.000000e+00> : vector<4xf32>
    %145 = vector.multi_reduction <add>, %144, %cst_63 [0] : vector<8x4xf32> to vector<4xf32>
    %146 = vector.shape_cast %145 : vector<4xf32> to vector<1x4xf32>
    %cst_64 = arith.constant 8.000000e+00 : f32
    %147 = vector.broadcast %cst_64 : f32 to vector<1x4xf32>
    %148 = arith.divf %146, %147 : vector<1x4xf32>
    %149 = vector.broadcast %148 : vector<1x4xf32> to vector<8x4xf32>
    %150 = arith.subf %144, %149 : vector<8x4xf32>
    %151 = arith.mulf %150, %150 : vector<8x4xf32>
    %cst_65 = arith.constant dense<0.000000e+00> : vector<4xf32>
    %152 = vector.multi_reduction <add>, %151, %cst_65 [0] : vector<8x4xf32> to vector<4xf32>
    %153 = vector.shape_cast %152 : vector<4xf32> to vector<1x4xf32>
    %cst_66 = arith.constant 8.000000e+00 : f32
    %154 = vector.broadcast %cst_66 : f32 to vector<1x4xf32>
    %155 = arith.divf %153, %154 : vector<1x4xf32>
    %156 = vector.broadcast %148 : vector<1x4xf32> to vector<8x4xf32>
    %157 = arith.subf %144, %156 : vector<8x4xf32>
    %cst_67 = arith.constant 0.00999999977 : f32
    %158 = vector.broadcast %cst_67 : f32 to vector<1x4xf32>
    %159 = arith.addf %155, %158 : vector<1x4xf32>
    %160 = math.rsqrt %159 : vector<1x4xf32>
    %161 = vector.broadcast %160 : vector<1x4xf32> to vector<8x4xf32>
    %162 = arith.mulf %157, %161 : vector<8x4xf32>
    %c0_68 = arith.constant 0 : index
    %c0_69 = arith.constant 0 : index
    %163 = vector.load %arg19[%c0_68, %c0_69] : memref<1x4xf32, #tpu.memory_space<vmem>>, vector<1x4xf32>
    %164 = vector.broadcast %163 : vector<1x4xf32> to vector<8x4xf32>
    %165 = arith.mulf %162, %164 : vector<8x4xf32>
    %c0_70 = arith.constant 0 : index
    %c0_71 = arith.constant 0 : index
    %166 = vector.load %arg20[%c0_70, %c0_71] : memref<1x4xf32, #tpu.memory_space<vmem>>, vector<1x4xf32>
    %167 = vector.broadcast %166 : vector<1x4xf32> to vector<8x4xf32>
    %168 = arith.addf %165, %167 : vector<8x4xf32>
    %c0_72 = arith.constant 0 : index
    %c0_73 = arith.constant 0 : index
    %169 = vector.load %arg21[%c0_72, %c0_73] : memref<4x32xf32, #tpu.memory_space<vmem>>, vector<4x32xf32>
    %cst_74 = arith.constant dense<0.000000e+00> : vector<8x32xf32>
    %170 = tpu.matmul %168, %169, %cst_74 {dimension_numbers = #tpu.dot_dimension_numbers<[1], [0], [0], [1], [0, 0, 1, 1], [], []>} : vector<8x4xf32>, vector<4x32xf32>, vector<8x32xf32> -> vector<8x32xf32>
    %c0_75 = arith.constant 0 : index
    %c0_76 = arith.constant 0 : index
    %171 = vector.load %arg22[%c0_75, %c0_76] : memref<1x32xf32, #tpu.memory_space<vmem>>, vector<1x32xf32>
    %172 = vector.broadcast %171 : vector<1x32xf32> to vector<8x32xf32>
    %173 = arith.addf %170, %172 : vector<8x32xf32>
    %c0_77 = arith.constant 0 : index
    %c0_78 = arith.constant 0 : index
    %174 = vector.load %arg23[%c0_77, %c0_78] : memref<1x32xf32, #tpu.memory_space<vmem>>, vector<1x32xf32>
    %175 = vector.broadcast %174 : vector<1x32xf32> to vector<8x32xf32>
    %176 = arith.mulf %173, %175 : vector<8x32xf32>
    %177 = vector.extract_strided_slice %176 {offsets = [0, 0], sizes = [8, 16], strides = [1, 1]} : vector<8x32xf32> to vector<8x16xf32>
    %178 = math.tanh %177 : vector<8x16xf32>
    %179 = vector.extract_strided_slice %176 {offsets = [0, 16], sizes = [8, 16], strides = [1, 1]} : vector<8x32xf32> to vector<8x16xf32>
    %180 = arith.addf %100, %179 : vector<8x16xf32>
    %181 = math.exp %178 : vector<8x16xf32>
    %182 = arith.mulf %180, %181 : vector<8x16xf32>
    %c0_79 = arith.constant 0 : index
    %c0_80 = arith.constant 0 : index
    %183 = vector.load %arg24[%c0_79, %c0_80] : memref<8x32xf32, #tpu.memory_space<vmem>>, vector<8x16xf32>
    tpu.vector_store %arg24[%c0_79, %c0_80], %182 {strides = array<i32>} : memref<8x32xf32, #tpu.memory_space<vmem>>, vector<8x16xf32>,
    %c0_81 = arith.constant 0 : index
    %c16 = arith.constant 16 : index
    %184 = vector.load %arg24[%c0_81, %c16] : memref<8x32xf32, #tpu.memory_space<vmem>>, vector<8x16xf32>
    tpu.vector_store %arg24[%c0_81, %c16], %96 {strides = array<i32>} : memref<8x32xf32, #tpu.memory_space<vmem>>, vector<8x16xf32>,
    %cst_82 = arith.constant dense<0.000000e+00> : vector<8xf32>
    %185 = vector.multi_reduction <add>, %88, %cst_82 [1] : vector<8x16xf32> to vector<8xf32>
    %186 = vector.shape_cast %185 : vector<8xf32> to vector<8x1xf32>
    %cst_83 = arith.constant dense<0.000000e+00> : vector<8xf32>
    %187 = vector.multi_reduction <add>, %178, %cst_83 [1] : vector<8x16xf32> to vector<8xf32>
    %188 = vector.shape_cast %187 : vector<8xf32> to vector<8x1xf32>
    %189 = arith.addf %186, %188 : vector<8x1xf32>
    %c0_84 = arith.constant 0 : index
    %c0_85 = arith.constant 0 : index
    %190 = vector.load %arg25[%c0_84, %c0_85] : memref<8x1xf32, #tpu.memory_space<vmem>>, vector<8x1xf32>
    tpu.vector_store %arg25[%c0_84, %c0_85], %189 {strides = array<i32>} : memref<8x1xf32, #tpu.memory_space<vmem>>, vector<8x1xf32>,
    return
  }
}

</mosaic_0001>

<llo_original>
// kernel: flow_forward.1
$region0: #{flow_forward.1}
  #allocation0 [shape = 'u32[]', space=smem, size = 0x4, offset = 0x4, fixed_abs, tag = 'smem constant byte address 0x4 - core index']
  #allocation1 [shape = 'u32[144,128]{1,0:T(1,128)}', space=vmem, size = 0x12000, scoped, tag = 'internal scratch']
  %s0 = inlined_call_operand.vmem [shape: f32[4], index: 0, kind: input, shape index: {}]
  %s1 = inlined_call_operand.vmem [shape: f32[8,32], index: 1, kind: input, shape index: {}]
  %s2 = inlined_call_operand.vmem [shape: f32[16,4], index: 2, kind: input, shape index: {}]
  %s3 = inlined_call_operand.vmem [shape: f32[1,4], index: 3, kind: input, shape index: {}]
  %s4 = inlined_call_operand.vmem [shape: f32[1,4], index: 4, kind: input, shape index: {}]
  %s5 = inlined_call_operand.vmem [shape: f32[1,4], index: 5, kind: input, shape index: {}]
  %s6 = inlined_call_operand.vmem [shape: f32[4,4], index: 6, kind: input, shape index: {}]
  %s7 = inlined_call_operand.vmem [shape: f32[1,4], index: 7, kind: input, shape index: {}]
  %s8 = inlined_call_operand.vmem [shape: f32[1,4], index: 8, kind: input, shape index: {}]
  %s9 = inlined_call_operand.vmem [shape: f32[1,4], index: 9, kind: input, shape index: {}]
  %s10 = inlined_call_operand.vmem [shape: f32[4,32], index: 10, kind: input, shape index: {}]
  %s11 = inlined_call_operand.vmem [shape: f32[1,32], index: 11, kind: input, shape index: {}]
  %s12 = inlined_call_operand.vmem [shape: f32[1,32], index: 12, kind: input, shape index: {}]
  %s13 = inlined_call_operand.vmem [shape: f32[16,4], index: 13, kind: input, shape index: {}]
  %s14 = inlined_call_operand.vmem [shape: f32[1,4], index: 14, kind: input, shape index: {}]
  %s15 = inlined_call_operand.vmem [shape: f32[1,4], index: 15, kind: input, shape index: {}]
  %s16 = inlined_call_operand.vmem [shape: f32[1,4], index: 16, kind: input, shape index: {}]
  %s17 = inlined_call_operand.vmem [shape: f32[4,4], index: 17, kind: input, shape index: {}]
  %s18 = inlined_call_operand.vmem [shape: f32[1,4], index: 18, kind: input, shape index: {}]
  %s19 = inlined_call_operand.vmem [shape: f32[1,4], index: 19, kind: input, shape index: {}]
  %s20 = inlined_call_operand.vmem [shape: f32[1,4], index: 20, kind: input, shape index: {}]
  %s21 = inlined_call_operand.vmem [shape: f32[4,32], index: 21, kind: input, shape index: {}]
  %s22 = inlined_call_operand.vmem [shape: f32[1,32], index: 22, kind: input, shape index: {}]
  %s23 = inlined_call_operand.vmem [shape: f32[1,32], index: 23, kind: input, shape index: {}]
  %s24 = inlined_call_operand.hbm [shape: f32[8,32], index: 24, kind: output, shape index: {0}]
  %s25 = inlined_call_operand.vmem [shape: f32[8,1], index: 25, kind: output, shape index: {1}]
  %26 = xla_tuple %s24, %s25
  %s27 = sld [smem:[#allocation0]]
  $region118: #{flow_forward.1} parent=0
    _
  %s29 = ssub.s32 1, %s27
  %s30 = scalar_select 0, %s29, %s27
  $region1: #{flow_forward.1} parent=0
    #allocation2 [shape = 'u8[512]{0}', space=smem, size = 0x200, scoped, tag = 'input window, operand 0, single buffered']
    #allocation3 [shape = 's32[1]{0}', space=sflag, size = 0x4, scoped, tag = 'scoped memory for flow_forward.1']
    #allocation4 [shape = 's32[1]{0}', space=sflag, size = 0x4, scoped, tag = 'scoped memory for flow_forward.1']
    #allocation5 [shape = 'u8[4096]{0}', space=vmem, size = 0x1000, scoped, tag = 'output window, operand 0, single buffered']
    %31 = vsyncpa [#allocation4], 0
    %32 = vsyncpa [#allocation3], 0
    // Predicated region
    $region2: #{flow_forward.1} parent=1 // pred_check
      _
    $region3: #{flow_forward.1} parent=1 // pred_check_branch
      %34 = sbr.rel (0) target = $region5
    $region4: #{flow_forward.1} parent=1 // pred_region
      %s36 = ssub.s32 16, 16
      %37 = vsyncadd [#allocation4], %s36
      %s39 = sshll.u32 %s0, 4
      %s40 = int_to_ptr.vmem [resolvable:$true] %s39
      %42 = dma.vmem_to_smem %s40, 16, [#allocation2], [#allocation4]
    $region5: #{flow_forward.1} parent=1 // pred_fallthru
      _
    // Predicated region
    $region6: #{flow_forward.1} parent=1 // pred_check
      _
    $region7: #{flow_forward.1} parent=1 // pred_check_branch
      %44 = sbr.rel (0) target = $region9
    $region8: #{flow_forward.1} parent=1 // pred_region
      _
    $region9: #{flow_forward.1} parent=1 // pred_fallthru
      _
    // Predicated region
    $region10: #{flow_forward.1} parent=1 // pred_check
      _
    $region11: #{flow_forward.1} parent=1 // pred_check_branch
      %46 = sbr.rel (0) target = $region13
    $region12: #{flow_forward.1} parent=1 // pred_region
      _
    $region13: #{flow_forward.1} parent=1 // pred_fallthru
      _
    // Predicated region
    $region14: #{flow_forward.1} parent=1 // pred_check
      _
    $region15: #{flow_forward.1} parent=1 // pred_check_branch
      %48 = sbr.rel (0) target = $region17
    $region16: #{flow_forward.1} parent=1 // pred_region
      _
    $region17: #{flow_forward.1} parent=1 // pred_fallthru
      _
    // Predicated region
    $region18: #{flow_forward.1} parent=1 // pred_check
      _
    $region19: #{flow_forward.1} parent=1 // pred_check_branch
      %50 = sbr.rel (0) target = $region21
    $region20: #{flow_forward.1} parent=1 // pred_region
      _
    $region21: #{flow_forward.1} parent=1 // pred_fallthru
      _
    // Predicated region
    $region22: #{flow_forward.1} parent=1 // pred_check
      _
    $region23: #{flow_forward.1} parent=1 // pred_check_branch
      %52 = sbr.rel (0) target = $region25
    $region24: #{flow_forward.1} parent=1 // pred_region
      _
    $region25: #{flow_forward.1} parent=1 // pred_fallthru
      _
    // Predicated region
    $region26: #{flow_forward.1} parent=1 // pred_check
      _
    $region27: #{flow_forward.1} parent=1 // pred_check_branch
      %54 = sbr.rel (0) target = $region29
    $region28: #{flow_forward.1} parent=1 // pred_region
      _
    $region29: #{flow_forward.1} parent=1 // pred_fallthru
      _
    // Predicated region
    $region30: #{flow_forward.1} parent=1 // pred_check
      _
    $region31: #{flow_forward.1} parent=1 // pred_check_branch
      %56 = sbr.rel (0) target = $region33
    $region32: #{flow_forward.1} parent=1 // pred_region
      _
    $region33: #{flow_forward.1} parent=1 // pred_fallthru
      _
    // Predicated region
    $region34: #{flow_forward.1} parent=1 // pred_check
      _
    $region35: #{flow_forward.1} parent=1 // pred_check_branch
      %58 = sbr.rel (0) target = $region37
    $region36: #{flow_forward.1} parent=1 // pred_region
      _
    $region37: #{flow_forward.1} parent=1 // pred_fallthru
      _
    // Predicated region
    $region38: #{flow_forward.1} parent=1 // pred_check
      _
    $region39: #{flow_forward.1} parent=1 // pred_check_branch
      %60 = sbr.rel (0) target = $region41
    $region40: #{flow_forward.1} parent=1 // pred_region
      _
    $region41: #{flow_forward.1} parent=1 // pred_fallthru
      _
    // Predicated region
    $region42: #{flow_forward.1} parent=1 // pred_check
      _
    $region43: #{flow_forward.1} parent=1 // pred_check_branch
      %62 = sbr.rel (0) target = $region45
    $region44: #{flow_forward.1} parent=1 // pred_region
      _
    $region45: #{flow_forward.1} parent=1 // pred_fallthru
      _
    // Predicated region
    $region46: #{flow_forward.1} parent=1 // pred_check
      _
    $region47: #{flow_forward.1} parent=1 // pred_check_branch
      %64 = sbr.rel (0) target = $region49
    $region48: #{flow_forward.1} parent=1 // pred_region
      _
    $region49: #{flow_forward.1} parent=1 // pred_fallthru
      _
    // Predicated region
    $region50: #{flow_forward.1} parent=1 // pred_check
      _
    $region51: #{flow_forward.1} parent=1 // pred_check_branch
      %66 = sbr.rel (0) target = $region53
    $region52: #{flow_forward.1} parent=1 // pred_region
      _
    $region53: #{flow_forward.1} parent=1 // pred_fallthru
      _
    // Predicated region
    $region54: #{flow_forward.1} parent=1 // pred_check
      _
    $region55: #{flow_forward.1} parent=1 // pred_check_branch
      %68 = sbr.rel (0) target = $region57
    $region56: #{flow_forward.1} parent=1 // pred_region
      _
    $region57: #{flow_forward.1} parent=1 // pred_fallthru
      _
    // Predicated region
    $region58: #{flow_forward.1} parent=1 // pred_check
      _
    $region59: #{flow_forward.1} parent=1 // pred_check_branch
      %70 = sbr.rel (0) target = $region61
    $region60: #{flow_forward.1} parent=1 // pred_region
      _
    $region61: #{flow_forward.1} parent=1 // pred_fallthru
      _
    // Predicated region
    $region62: #{flow_forward.1} parent=1 // pred_check
      _
    $region63: #{flow_forward.1} parent=1 // pred_check_branch
      %72 = sbr.rel (0) target = $region65
    $region64: #{flow_forward.1} parent=1 // pred_region
      _
    $region65: #{flow_forward.1} parent=1 // pred_fallthru
      _
    // Predicated region
    $region66: #{flow_forward.1} parent=1 // pred_check
      _
    $region67: #{flow_forward.1} parent=1 // pred_check_branch
      %74 = sbr.rel (0) target = $region69
    $region68: #{flow_forward.1} parent=1 // pred_region
      _
    $region69: #{flow_forward.1} parent=1 // pred_fallthru
      _
    // Predicated region
    $region70: #{flow_forward.1} parent=1 // pred_check
      _
    $region71: #{flow_forward.1} parent=1 // pred_check_branch
      %76 = sbr.rel (0) target = $region73
    $region72: #{flow_forward.1} parent=1 // pred_region
      _
    $region73: #{flow_forward.1} parent=1 // pred_fallthru
      _
    // Predicated region
    $region74: #{flow_forward.1} parent=1 // pred_check
      _
    $region75: #{flow_forward.1} parent=1 // pred_check_branch
      %78 = sbr.rel (0) target = $region77
    $region76: #{flow_forward.1} parent=1 // pred_region
      _
    $region77: #{flow_forward.1} parent=1 // pred_fallthru
      _
    // Predicated region
    $region78: #{flow_forward.1} parent=1 // pred_check
      _
    $region79: #{flow_forward.1} parent=1 // pred_check_branch
      %80 = sbr.rel (0) target = $region81
    $region80: #{flow_forward.1} parent=1 // pred_region
      _
    $region81: #{flow_forward.1} parent=1 // pred_fallthru
      _
    // Predicated region
    $region82: #{flow_forward.1} parent=1 // pred_check
      _
    $region83: #{flow_forward.1} parent=1 // pred_check_branch
      %82 = sbr.rel (0) target = $region85
    $region84: #{flow_forward.1} parent=1 // pred_region
      _
    $region85: #{flow_forward.1} parent=1 // pred_fallthru
      _
    // Predicated region
    $region86: #{flow_forward.1} parent=1 // pred_check
      _
    $region87: #{flow_forward.1} parent=1 // pred_check_branch
      %84 = sbr.rel (0) target = $region89
    $region88: #{flow_forward.1} parent=1 // pred_region
      _
    $region89: #{flow_forward.1} parent=1 // pred_fallthru
      _
    // Predicated region
    $region90: #{flow_forward.1} parent=1 // pred_check
      _
    $region91: #{flow_forward.1} parent=1 // pred_check_branch
      %86 = sbr.rel (0) target = $region93
    $region92: #{flow_forward.1} parent=1 // pred_region
      _
    $region93: #{flow_forward.1} parent=1 // pred_fallthru
      _
    // Predicated region
    $region94: #{flow_forward.1} parent=1 // pred_check
      _
    $region95: #{flow_forward.1} parent=1 // pred_check_branch
      %88 = sbr.rel (0) target = $region97
    $region96: #{flow_forward.1} parent=1 // pred_region
      _
    $region97: #{flow_forward.1} parent=1 // pred_fallthru
      _
    // Predicated region
    $region98: #{flow_forward.1} parent=1 // pred_check
      _
    $region99: #{flow_forward.1} parent=1 // pred_check_branch
      %90 = sbr.rel (0) target = $region101
    $region100: #{flow_forward.1} parent=1 // pred_region
      %91 = dma.done [#allocation4], 16
    $region101: #{flow_forward.1} parent=1 // pred_fallthru
      _
    %92 = sfence
    %s93 = sld [smem:[#allocation2]]
    %s94 = sld [smem:[#allocation2 + $0x1]]
    %s95 = sld [smem:[#allocation2 + $0x2]]
    %s96 = sld [smem:[#allocation2 + $0x3]]
    %v97 = vld [vmem:[%s1] sm:$0xff]
    %v98 = vstv %s93
    %v99 = vadd.f32 %v97, %v98
    %v100 = vstv %s94
    %v101 = vmul.f32 %v99, %v100
    %v102 = vld [vmem:[%s2] sm:$0xff]
    %v103 = vld [vmem:[%s2 + $0x8] sm:$0xff]
    %v104 = vld [vmem:[%s3] sm:$0x1]
    %v106 = vlaneseq
    %v107 = vshrl.u32 %v106, 7
    %v108 = vsub.s32 0, %v107
    %v109 = vrot.slane %v104, %v108
    %vm111 = vcmask 130048
    %v113 = vsel %vm111, %v101, 0
    %115 = vmatprep.subr.mxu0 0.0
    %116 = vmatpush1.msra.mxu0 %v102
    %117 = vmatprep.subr.mxu0 0.0
    %118 = vmatpush1.msra.mxu0 %v103
    %119 = vmatprep.subr.mxu0 0.0
    %120 = vmatpush1.msra.mxu0 0.0
    %121 = vmatprep.subr.mxu0 0.0
    %122 = vmatpush1.msra.mxu0 0.0
    %123 = vmatprep.subr.mxu0 0.0
    %124 = vmatpush1.msra.mxu0 0.0
    %125 = vmatprep.subr.mxu0 0.0
    %126 = vmatpush1.msra.mxu0 0.0
    %127 = vmatprep.subr.mxu0 0.0
    %128 = vmatpush1.msra.mxu0 0.0
    %129 = vmatprep.subr.mxu0 0.0
    %130 = vmatpush1.msra.mxu0 0.0
    %131 = vmatprep.subr.mxu0 0.0
    %132 = vmatpush1.msra.mxu0 0.0
    %133 = vmatprep.subr.mxu0 0.0
    %134 = vmatpush1.msra.mxu0 0.0
    %135 = vmatprep.subr.mxu0 0.0
    %136 = vmatpush1.msra.mxu0 0.0
    %137 = vmatprep.subr.mxu0 0.0
    %138 = vmatpush1.msra.mxu0 0.0
    %139 = vmatprep.subr.mxu0 0.0
    %140 = vmatpush1.msra.mxu0 0.0
    %141 = vmatprep.subr.mxu0 0.0
    %142 = vmatpush1.msra.mxu0 0.0
    %143 = vmatprep.subr.mxu0 0.0
    %144 = vmatpush1.msra.mxu0 0.0
    %145 = vmatprep.subr.mxu0 0.0
    %146 = vmatpush1.msra.mxu0 0.0
    %147 = vmatprep.subr.mxu0 0.0
    %148 = vmatpush1.msra.mxu0 0.0
    %149 = vmatprep.subr.mxu0 0.0
    %150 = vmatpush1.msra.mxu0 0.0
    %151 = vmatprep.subr.mxu0 0.0
    %152 = vmatpush1.msra.mxu0 0.0
    %153 = vmatprep.subr.mxu0 0.0
    %154 = vmatpush1.msra.mxu0 0.0
    %155 = vmatprep.subr.mxu0 0.0
    %156 = vmatpush1.msra.mxu0 0.0
    %157 = vmatprep.subr.mxu0 0.0
    %158 = vmatpush1.msra.mxu0 0.0
    %159 = vmatprep.subr.mxu0 0.0
    %160 = vmatpush1.msra.mxu0 0.0
    %161 = vmatprep.subr.mxu0 0.0
    %162 = vmatpush1.msra.mxu0 0.0
    %163 = vmatprep.subr.mxu0 0.0
    %164 = vmatpush1.msra.mxu0 0.0
    %165 = vmatprep.subr.mxu0 0.0
    %166 = vmatpush1.msra.mxu0 0.0
    %167 = vmatprep.subr.mxu0 0.0
    %168 = vmatpush1.msra.mxu0 0.0
    %169 = vmatprep.subr.mxu0 0.0
    %170 = vmatpush1.msra.mxu0 0.0
    %171 = vmatprep.subr.mxu0 0.0
    %172 = vmatpush1.msra.mxu0 0.0
    %173 = vmatprep.subr.mxu0 0.0
    %174 = vmatpush1.msra.mxu0 0.0
    %175 = vmatprep.subr.mxu0 0.0
    %176 = vmatpush1.msra.mxu0 0.0
    %177 = vmatprep.subr.mxu0 0.0
    %178 = vmatpush1.msra.mxu0 0.0
    %179 = vmatprep.mubr.f32.mxu0 0.0
    %180 = vmatmul.mubr.f32.gmra.mrb[0].mxu0 %v113
    %v181 = vpop.f32.mrb[0].mxu0
    %v182 = vadd.f32 %v109, %v181
    %v183 = vpop.f32.mrb[0].mxu0
    %184 = vdwg.mxu0
    %vm185 = vcmp.gt.f32.partialorder %v182, 0.0
    %v186 = vmul.f32 %v182, 0.01
    %v187 = vsel %vm185, %v182, %v186
    %vm188 = vcmask 31744
    %v189 = vsel %vm188, %v187, 0.0
    %v190 = vrot.slane %v189, 4
    %v191 = vadd.f32 %v189, %v190
    %v192 = vrot.slane %v191, 2
    %v193 = vadd.f32 %v191, %v192
    %v194 = vrot.slane %v193, 1
    %v195 = vadd.f32 %v193, %v194
    %v196 = vrcp.pop 8.0
    %v197 = vmul.f32 %v195, %v196
    %v198 = vsub.f32 %v187, %v197
    %v199 = vmul.f32 %v198, %v198
    %v200 = vsel %vm188, %v199, 0.0
    %v201 = vrot.slane %v200, 4
    %v202 = vadd.f32 %v200, %v201
    %v203 = vrot.slane %v202, 2
    %v204 = vadd.f32 %v202, %v203
    %v205 = vrot.slane %v204, 1
    %v206 = vadd.f32 %v204, %v205
    %v207 = vmul.f32 %v206, %v196
    %v208 = vadd.f32 %v207, 0.01
    %v209 = vrsqrt.pop %v208
    %v210 = vmul.f32 %v198, %v209
    %v211 = vld [vmem:[%s4] sm:$0x1]
    %v213 = vlaneseq
    %v214 = vshrl.u32 %v213, 7
    %v215 = vsub.s32 0, %v214
    %v216 = vrot.slane %v211, %v215
    %v218 = vmul.f32 %v210, %v216
    %v219 = vld [vmem:[%s5] sm:$0x1]
    %v221 = vlaneseq
    %v222 = vshrl.u32 %v221, 7
    %v223 = vsub.s32 0, %v222
    %v224 = vrot.slane %v219, %v223
    %v226 = vadd.f32 %v218, %v224
    %v227 = vld [vmem:[%s6] sm:$0xf]
    %v228 = vld [vmem:[%s7] sm:$0x1]
    %v230 = vlaneseq
    %v231 = vshrl.u32 %v230, 7
    %v232 = vsub.s32 0, %v231
    %v233 = vrot.slane %v228, %v232
    %v236 = vsel %vm188, %v226, 0
    %vm238 = vcmask 1043456
    %v240 = vsel %vm238, %v227, 0
    %242 = vmatprep.subr.mxu0 0.0
    %243 = vmatpush1.msra.mxu0 %v240
    %244 = vmatprep.subr.mxu0 0.0
    %245 = vmatpush1.msra.mxu0 0.0
    %246 = vmatprep.subr.mxu0 0.0
    %247 = vmatpush1.msra.mxu0 0.0
    %248 = vmatprep.subr.mxu0 0.0
    %249 = vmatpush1.msra.mxu0 0.0
    %250 = vmatprep.subr.mxu0 0.0
    %251 = vmatpush1.msra.mxu0 0.0
    %252 = vmatprep.subr.mxu0 0.0
    %253 = vmatpush1.msra.mxu0 0.0
    %254 = vmatprep.subr.mxu0 0.0
    %255 = vmatpush1.msra.mxu0 0.0
    %256 = vmatprep.subr.mxu0 0.0
    %257 = vmatpush1.msra.mxu0 0.0
    %258 = vmatprep.subr.mxu0 0.0
    %259 = vmatpush1.msra.mxu0 0.0
    %260 = vmatprep.subr.mxu0 0.0
    %261 = vmatpush1.msra.mxu0 0.0
    %262 = vmatprep.subr.mxu0 0.0
    %263 = vmatpush1.msra.mxu0 0.0
    %264 = vmatprep.subr.mxu0 0.0
    %265 = vmatpush1.msra.mxu0 0.0
    %266 = vmatprep.subr.mxu0 0.0
    %267 = vmatpush1.msra.mxu0 0.0
    %268 = vmatprep.subr.mxu0 0.0
    %269 = vmatpush1.msra.mxu0 0.0
    %270 = vmatprep.subr.mxu0 0.0
    %271 = vmatpush1.msra.mxu0 0.0
    %272 = vmatprep.subr.mxu0 0.0
    %273 = vmatpush1.msra.mxu0 0.0
    %274 = vmatprep.subr.mxu0 0.0
    %275 = vmatpush1.msra.mxu0 0.0
    %276 = vmatprep.subr.mxu0 0.0
    %277 = vmatpush1.msra.mxu0 0.0
    %278 = vmatprep.subr.mxu0 0.0
    %279 = vmatpush1.msra.mxu0 0.0
    %280 = vmatprep.subr.mxu0 0.0
    %281 = vmatpush1.msra.mxu0 0.0
    %282 = vmatprep.subr.mxu0 0.0
    %283 = vmatpush1.msra.mxu0 0.0
    %284 = vmatprep.subr.mxu0 0.0
    %285 = vmatpush1.msra.mxu0 0.0
    %286 = vmatprep.subr.mxu0 0.0
    %287 = vmatpush1.msra.mxu0 0.0
    %288 = vmatprep.subr.mxu0 0.0
    %289 = vmatpush1.msra.mxu0 0.0
    %290 = vmatprep.subr.mxu0 0.0
    %291 = vmatpush1.msra.mxu0 0.0
    %292 = vmatprep.subr.mxu0 0.0
    %293 = vmatpush1.msra.mxu0 0.0
    %294 = vmatprep.subr.mxu0 0.0
    %295 = vmatpush1.msra.mxu0 0.0
    %296 = vmatprep.subr.mxu0 0.0
    %297 = vmatpush1.msra.mxu0 0.0
    %298 = vmatprep.subr.mxu0 0.0
    %299 = vmatpush1.msra.mxu0 0.0
    %300 = vmatprep.subr.mxu0 0.0
    %301 = vmatpush1.msra.mxu0 0.0
    %302 = vmatprep.subr.mxu0 0.0
    %303 = vmatpush1.msra.mxu0 0.0
    %304 = vmatprep.subr.mxu0 0.0
    %305 = vmatpush1.msra.mxu0 0.0
    %306 = vmatprep.mubr.f32.mxu0 0.0
    %307 = vmatmul.mubr.f32.gmra.mrb[0].mxu0 %v236
    %v308 = vpop.f32.mrb[0].mxu0
    %v309 = vadd.f32 %v233, %v308
    %v310 = vpop.f32.mrb[0].mxu0
    %311 = vdwg.mxu0
    %vm312 = vcmp.gt.f32.partialorder %v309, 0.0
    %v313 = vmul.f32 %v309, 0.01
    %v314 = vsel %vm312, %v309, %v313
    %v315 = vsel %vm188, %v314, 0.0
    %v316 = vrot.slane %v315, 4
    %v317 = vadd.f32 %v315, %v316
    %v318 = vrot.slane %v317, 2
    %v319 = vadd.f32 %v317, %v318
    %v320 = vrot.slane %v319, 1
    %v321 = vadd.f32 %v319, %v320
    %v322 = vmul.f32 %v321, %v196
    %v323 = vsub.f32 %v314, %v322
    %v324 = vmul.f32 %v323, %v323
    %v325 = vsel %vm188, %v324, 0.0
    %v326 = vrot.slane %v325, 4
    %v327 = vadd.f32 %v325, %v326
    %v328 = vrot.slane %v327, 2
    %v329 = vadd.f32 %v327, %v328
    %v330 = vrot.slane %v329, 1
    %v331 = vadd.f32 %v329, %v330
    %v332 = vmul.f32 %v331, %v196
    %v333 = vadd.f32 %v332, 0.01
    %v334 = vrsqrt.pop %v333
    %v335 = vmul.f32 %v323, %v334
    %v336 = vld [vmem:[%s8] sm:$0x1]
    %v338 = vlaneseq
    %v339 = vshrl.u32 %v338, 7
    %v340 = vsub.s32 0, %v339
    %v341 = vrot.slane %v336, %v340
    %v343 = vmul.f32 %v335, %v341
    %v344 = vld [vmem:[%s9] sm:$0x1]
    %v346 = vlaneseq
    %v347 = vshrl.u32 %v346, 7
    %v348 = vsub.s32 0, %v347
    %v349 = vrot.slane %v344, %v348
    %v351 = vadd.f32 %v343, %v349
    %v352 = vld [vmem:[%s10] sm:$0xf]
    %v353 = vld [vmem:[%s11] sm:$0x1]
    %v355 = vlaneseq
    %v356 = vshrl.u32 %v355, 7
    %v357 = vsub.s32 0, %v356
    %v358 = vrot.slane %v353, %v357
    %v361 = vsel %vm188, %v351, 0
    %v364 = vsel %vm238, %v352, 0
    %366 = vmatprep.subr.mxu0 0.0
    %367 = vmatpush1.msra.mxu0 %v364
    %368 = vmatprep.subr.mxu0 0.0
    %369 = vmatpush1.msra.mxu0 0.0
    %370 = vmatprep.subr.mxu0 0.0
    %371 = vmatpush1.msra.mxu0 0.0
    %372 = vmatprep.subr.mxu0 0.0
    %373 = vmatpush1.msra.mxu0 0.0
    %374 = vmatprep.subr.mxu0 0.0
    %375 = vmatpush1.msra.mxu0 0.0
    %376 = vmatprep.subr.mxu0 0.0
    %377 = vmatpush1.msra.mxu0 0.0
    %378 = vmatprep.subr.mxu0 0.0
    %379 = vmatpush1.msra.mxu0 0.0
    %380 = vmatprep.subr.mxu0 0.0
    %381 = vmatpush1.msra.mxu0 0.0
    %382 = vmatprep.subr.mxu0 0.0
    %383 = vmatpush1.msra.mxu0 0.0
    %384 = vmatprep.subr.mxu0 0.0
    %385 = vmatpush1.msra.mxu0 0.0
    %386 = vmatprep.subr.mxu0 0.0
    %387 = vmatpush1.msra.mxu0 0.0
    %388 = vmatprep.subr.mxu0 0.0
    %389 = vmatpush1.msra.mxu0 0.0
    %390 = vmatprep.subr.mxu0 0.0
    %391 = vmatpush1.msra.mxu0 0.0
    %392 = vmatprep.subr.mxu0 0.0
    %393 = vmatpush1.msra.mxu0 0.0
    %394 = vmatprep.subr.mxu0 0.0
    %395 = vmatpush1.msra.mxu0 0.0
    %396 = vmatprep.subr.mxu0 0.0
    %397 = vmatpush1.msra.mxu0 0.0
    %398 = vmatprep.subr.mxu0 0.0
    %399 = vmatpush1.msra.mxu0 0.0
    %400 = vmatprep.subr.mxu0 0.0
    %401 = vmatpush1.msra.mxu0 0.0
    %402 = vmatprep.subr.mxu0 0.0
    %403 = vmatpush1.msra.mxu0 0.0
    %404 = vmatprep.subr.mxu0 0.0
    %405 = vmatpush1.msra.mxu0 0.0
    %406 = vmatprep.subr.mxu0 0.0
    %407 = vmatpush1.msra.mxu0 0.0
    %408 = vmatprep.subr.mxu0 0.0
    %409 = vmatpush1.msra.mxu0 0.0
    %410 = vmatprep.subr.mxu0 0.0
    %411 = vmatpush1.msra.mxu0 0.0
    %412 = vmatprep.subr.mxu0 0.0
    %413 = vmatpush1.msra.mxu0 0.0
    %414 = vmatprep.subr.mxu0 0.0
    %415 = vmatpush1.msra.mxu0 0.0
    %416 = vmatprep.subr.mxu0 0.0
    %417 = vmatpush1.msra.mxu0 0.0
    %418 = vmatprep.subr.mxu0 0.0
    %419 = vmatpush1.msra.mxu0 0.0
    %420 = vmatprep.subr.mxu0 0.0
    %421 = vmatpush1.msra.mxu0 0.0
    %422 = vmatprep.subr.mxu0 0.0
    %423 = vmatpush1.msra.mxu0 0.0
    %424 = vmatprep.subr.mxu0 0.0
    %425 = vmatpush1.msra.mxu0 0.0
    %426 = vmatprep.subr.mxu0 0.0
    %427 = vmatpush1.msra.mxu0 0.0
    %428 = vmatprep.subr.mxu0 0.0
    %429 = vmatpush1.msra.mxu0 0.0
    %430 = vmatprep.mubr.f32.mxu0 0.0
    %431 = vmatmul.mubr.f32.gmra.mrb[0].mxu0 %v361
    %v432 = vpop.f32.mrb[0].mxu0
    %v433 = vadd.f32 %v358, %v432
    %v434 = vpop.f32.mrb[0].mxu0
    %435 = vdwg.mxu0
    %v436 = vld [vmem:[%s12] sm:$0x1]
    %v438 = vlaneseq
    %v439 = vshrl.u32 %v438, 7
    %v440 = vsub.s32 0, %v439
    %v441 = vrot.slane %v436, %v440
    %v443 = vmul.f32 %v433, %v441
    %v444 = vtanh.pop %v443
    %v445 = vadd.f32 %v101, %v443
    %v446 = vmul.f32 %v444, 1.442695
    %v447 = vpow.pop %v446
    %449 = vrot.lane.b32.xlu0 %v447, 16
    %v450 = vpop.permute.xlu0 %449
    %v452 = vmul.f32 %v445, %v450
    %v453 = vstv %s95
    %v454 = vadd.f32 %v452, %v453
    %v455 = vstv %s96
    %v456 = vmul.f32 %v454, %v455
    %v457 = vadd.f32 %v101, %v453
    %v458 = vmul.f32 %v457, %v455
    %v459 = vld [vmem:[%s13] sm:$0xff]
    %v460 = vld [vmem:[%s13 + $0x8] sm:$0xff]
    %v461 = vld [vmem:[%s14] sm:$0x1]
    %v463 = vlaneseq
    %v464 = vshrl.u32 %v463, 7
    %v465 = vsub.s32 0, %v464
    %v466 = vrot.slane %v461, %v465
    %469 = vrot.lane.b32.xlu0 %v456, 112
    %v470 = vpop.permute.xlu0 %469
    %v471 = vsel %vm111, %v470, 0
    %473 = vmatprep.subr.mxu0 0.0
    %474 = vmatpush1.msra.mxu0 %v459
    %475 = vmatprep.subr.mxu0 0.0
    %476 = vmatpush1.msra.mxu0 %v460
    %477 = vmatprep.subr.mxu0 0.0
    %478 = vmatpush1.msra.mxu0 0.0
    %479 = vmatprep.subr.mxu0 0.0
    %480 = vmatpush1.msra.mxu0 0.0
    %481 = vmatprep.subr.mxu0 0.0
    %482 = vmatpush1.msra.mxu0 0.0
    %483 = vmatprep.subr.mxu0 0.0
    %484 = vmatpush1.msra.mxu0 0.0
    %485 = vmatprep.subr.mxu0 0.0
    %486 = vmatpush1.msra.mxu0 0.0
    %487 = vmatprep.subr.mxu0 0.0
    %488 = vmatpush1.msra.mxu0 0.0
    %489 = vmatprep.subr.mxu0 0.0
    %490 = vmatpush1.msra.mxu0 0.0
    %491 = vmatprep.subr.mxu0 0.0
    %492 = vmatpush1.msra.mxu0 0.0
    %493 = vmatprep.subr.mxu0 0.0
    %494 = vmatpush1.msra.mxu0 0.0
    %495 = vmatprep.subr.mxu0 0.0
    %496 = vmatpush1.msra.mxu0 0.0
    %497 = vmatprep.subr.mxu0 0.0
    %498 = vmatpush1.msra.mxu0 0.0
    %499 = vmatprep.subr.mxu0 0.0
    %500 = vmatpush1.msra.mxu0 0.0
    %501 = vmatprep.subr.mxu0 0.0
    %502 = vmatpush1.msra.mxu0 0.0
    %503 = vmatprep.subr.mxu0 0.0
    %504 = vmatpush1.msra.mxu0 0.0
    %505 = vmatprep.subr.mxu0 0.0
    %506 = vmatpush1.msra.mxu0 0.0
    %507 = vmatprep.subr.mxu0 0.0
    %508 = vmatpush1.msra.mxu0 0.0
    %509 = vmatprep.subr.mxu0 0.0
    %510 = vmatpush1.msra.mxu0 0.0
    %511 = vmatprep.subr.mxu0 0.0
    %512 = vmatpush1.msra.mxu0 0.0
    %513 = vmatprep.subr.mxu0 0.0
    %514 = vmatpush1.msra.mxu0 0.0
    %515 = vmatprep.subr.mxu0 0.0
    %516 = vmatpush1.msra.mxu0 0.0
    %517 = vmatprep.subr.mxu0 0.0
    %518 = vmatpush1.msra.mxu0 0.0
    %519 = vmatprep.subr.mxu0 0.0
    %520 = vmatpush1.msra.mxu0 0.0
    %521 = vmatprep.subr.mxu0 0.0
    %522 = vmatpush1.msra.mxu0 0.0
    %523 = vmatprep.subr.mxu0 0.0
    %524 = vmatpush1.msra.mxu0 0.0
    %525 = vmatprep.subr.mxu0 0.0
    %526 = vmatpush1.msra.mxu0 0.0
    %527 = vmatprep.subr.mxu0 0.0
    %528 = vmatpush1.msra.mxu0 0.0
    %529 = vmatprep.subr.mxu0 0.0
    %530 = vmatpush1.msra.mxu0 0.0
    %531 = vmatprep.subr.mxu0 0.0
    %532 = vmatpush1.msra.mxu0 0.0
    %533 = vmatprep.subr.mxu0 0.0
    %534 = vmatpush1.msra.mxu0 0.0
    %535 = vmatprep.subr.mxu0 0.0
    %536 = vmatpush1.msra.mxu0 0.0
    %537 = vmatprep.mubr.f32.mxu0 0.0
    %538 = vmatmul.mubr.f32.gmra.mrb[0].mxu0 %v471
    %v539 = vpop.f32.mrb[0].mxu0
    %v540 = vadd.f32 %v466, %v539
    %v541 = vpop.f32.mrb[0].mxu0
    %542 = vdwg.mxu0
    %vm543 = vcmp.gt.f32.partialorder %v540, 0.0
    %v544 = vmul.f32 %v540, 0.01
    %v545 = vsel %vm543, %v540, %v544
    %v546 = vsel %vm188, %v545, 0.0
    %v547 = vrot.slane %v546, 4
    %v548 = vadd.f32 %v546, %v547
    %v549 = vrot.slane %v548, 2
    %v550 = vadd.f32 %v548, %v549
    %v551 = vrot.slane %v550, 1
    %v552 = vadd.f32 %v550, %v551
    %v553 = vmul.f32 %v552, %v196
    %v554 = vsub.f32 %v545, %v553
    %v555 = vmul.f32 %v554, %v554
    %v556 = vsel %vm188, %v555, 0.0
    %v557 = vrot.slane %v556, 4
    %v558 = vadd.f32 %v556, %v557
    %v559 = vrot.slane %v558, 2
    %v560 = vadd.f32 %v558, %v559
    %v561 = vrot.slane %v560, 1
    %v562 = vadd.f32 %v560, %v561
    %v563 = vmul.f32 %v562, %v196
    %v564 = vadd.f32 %v563, 0.01
    %v565 = vrsqrt.pop %v564
    %v566 = vmul.f32 %v554, %v565
    %v567 = vld [vmem:[%s15] sm:$0x1]
    %v569 = vlaneseq
    %v570 = vshrl.u32 %v569, 7
    %v571 = vsub.s32 0, %v570
    %v572 = vrot.slane %v567, %v571
    %v574 = vmul.f32 %v566, %v572
    %v575 = vld [vmem:[%s16] sm:$0x1]
    %v577 = vlaneseq
    %v578 = vshrl.u32 %v577, 7
    %v579 = vsub.s32 0, %v578
    %v580 = vrot.slane %v575, %v579
    %v582 = vadd.f32 %v574, %v580
    %v583 = vld [vmem:[%s17] sm:$0xf]
    %v584 = vld [vmem:[%s18] sm:$0x1]
    %v586 = vlaneseq
    %v587 = vshrl.u32 %v586, 7
    %v588 = vsub.s32 0, %v587
    %v589 = vrot.slane %v584, %v588
    %v592 = vsel %vm188, %v582, 0
    %v595 = vsel %vm238, %v583, 0
    %597 = vmatprep.subr.mxu0 0.0
    %598 = vmatpush1.msra.mxu0 %v595
    %599 = vmatprep.subr.mxu0 0.0
    %600 = vmatpush1.msra.mxu0 0.0
    %601 = vmatprep.subr.mxu0 0.0
    %602 = vmatpush1.msra.mxu0 0.0
    %603 = vmatprep.subr.mxu0 0.0
    %604 = vmatpush1.msra.mxu0 0.0
    %605 = vmatprep.subr.mxu0 0.0
    %606 = vmatpush1.msra.mxu0 0.0
    %607 = vmatprep.subr.mxu0 0.0
    %608 = vmatpush1.msra.mxu0 0.0
    %609 = vmatprep.subr.mxu0 0.0
    %610 = vmatpush1.msra.mxu0 0.0
    %611 = vmatprep.subr.mxu0 0.0
    %612 = vmatpush1.msra.mxu0 0.0
    %613 = vmatprep.subr.mxu0 0.0
    %614 = vmatpush1.msra.mxu0 0.0
    %615 = vmatprep.subr.mxu0 0.0
    %616 = vmatpush1.msra.mxu0 0.0
    %617 = vmatprep.subr.mxu0 0.0
    %618 = vmatpush1.msra.mxu0 0.0
    %619 = vmatprep.subr.mxu0 0.0
    %620 = vmatpush1.msra.mxu0 0.0
    %621 = vmatprep.subr.mxu0 0.0
    %622 = vmatpush1.msra.mxu0 0.0
    %623 = vmatprep.subr.mxu0 0.0
    %624 = vmatpush1.msra.mxu0 0.0
    %625 = vmatprep.subr.mxu0 0.0
    %626 = vmatpush1.msra.mxu0 0.0
    %627 = vmatprep.subr.mxu0 0.0
    %628 = vmatpush1.msra.mxu0 0.0
    %629 = vmatprep.subr.mxu0 0.0
    %630 = vmatpush1.msra.mxu0 0.0
    %631 = vmatprep.subr.mxu0 0.0
    %632 = vmatpush1.msra.mxu0 0.0
    %633 = vmatprep.subr.mxu0 0.0
    %634 = vmatpush1.msra.mxu0 0.0
    %635 = vmatprep.subr.mxu0 0.0
    %636 = vmatpush1.msra.mxu0 0.0
    %637 = vmatprep.subr.mxu0 0.0
    %638 = vmatpush1.msra.mxu0 0.0
    %639 = vmatprep.subr.mxu0 0.0
    %640 = vmatpush1.msra.mxu0 0.0
    %641 = vmatprep.subr.mxu0 0.0
    %642 = vmatpush1.msra.mxu0 0.0
    %643 = vmatprep.subr.mxu0 0.0
    %644 = vmatpush1.msra.mxu0 0.0
    %645 = vmatprep.subr.mxu0 0.0
    %646 = vmatpush1.msra.mxu0 0.0
    %647 = vmatprep.subr.mxu0 0.0
    %648 = vmatpush1.msra.mxu0 0.0
    %649 = vmatprep.subr.mxu0 0.0
    %650 = vmatpush1.msra.mxu0 0.0
    %651 = vmatprep.subr.mxu0 0.0
    %652 = vmatpush1.msra.mxu0 0.0
    %653 = vmatprep.subr.mxu0 0.0
    %654 = vmatpush1.msra.mxu0 0.0
    %655 = vmatprep.subr.mxu0 0.0
    %656 = vmatpush1.msra.mxu0 0.0
    %657 = vmatprep.subr.mxu0 0.0
    %658 = vmatpush1.msra.mxu0 0.0
    %659 = vmatprep.subr.mxu0 0.0
    %660 = vmatpush1.msra.mxu0 0.0
    %661 = vmatprep.mubr.f32.mxu0 0.0
    %662 = vmatmul.mubr.f32.gmra.mrb[0].mxu0 %v592
    %v663 = vpop.f32.mrb[0].mxu0
    %v664 = vadd.f32 %v589, %v663
    %v665 = vpop.f32.mrb[0].mxu0
    %666 = vdwg.mxu0
    %vm667 = vcmp.gt.f32.partialorder %v664, 0.0
    %v668 = vmul.f32 %v664, 0.01
    %v669 = vsel %vm667, %v664, %v668
    %v670 = vsel %vm188, %v669, 0.0
    %v671 = vrot.slane %v670, 4
    %v672 = vadd.f32 %v670, %v671
    %v673 = vrot.slane %v672, 2
    %v674 = vadd.f32 %v672, %v673
    %v675 = vrot.slane %v674, 1
    %v676 = vadd.f32 %v674, %v675
    %v677 = vmul.f32 %v676, %v196
    %v678 = vsub.f32 %v669, %v677
    %v679 = vmul.f32 %v678, %v678
    %v680 = vsel %vm188, %v679, 0.0
    %v681 = vrot.slane %v680, 4
    %v682 = vadd.f32 %v680, %v681
    %v683 = vrot.slane %v682, 2
    %v684 = vadd.f32 %v682, %v683
    %v685 = vrot.slane %v684, 1
    %v686 = vadd.f32 %v684, %v685
    %v687 = vmul.f32 %v686, %v196
    %v688 = vadd.f32 %v687, 0.01
    %v689 = vrsqrt.pop %v688
    %v690 = vmul.f32 %v678, %v689
    %v691 = vld [vmem:[%s19] sm:$0x1]
    %v693 = vlaneseq
    %v694 = vshrl.u32 %v693, 7
    %v695 = vsub.s32 0, %v694
    %v696 = vrot.slane %v691, %v695
    %v698 = vmul.f32 %v690, %v696
    %v699 = vld [vmem:[%s20] sm:$0x1]
    %v701 = vlaneseq
    %v702 = vshrl.u32 %v701, 7
    %v703 = vsub.s32 0, %v702
    %v704 = vrot.slane %v699, %v703
    %v706 = vadd.f32 %v698, %v704
    %v707 = vld [vmem:[%s21] sm:$0xf]
    %v708 = vld [vmem:[%s22] sm:$0x1]
    %v710 = vlaneseq
    %v711 = vshrl.u32 %v710, 7
    %v712 = vsub.s32 0, %v711
    %v713 = vrot.slane %v708, %v712
    %v716 = vsel %vm188, %v706, 0
    %v719 = vsel %vm238, %v707, 0
    %721 = vmatprep.subr.mxu0 0.0
    %722 = vmatpush1.msra.mxu0 %v719
    %723 = vmatprep.subr.mxu0 0.0
    %724 = vmatpush1.msra.mxu0 0.0
    %725 = vmatprep.subr.mxu0 0.0
    %726 = vmatpush1.msra.mxu0 0.0
    %727 = vmatprep.subr.mxu0 0.0
    %728 = vmatpush1.msra.mxu0 0.0
    %729 = vmatprep.subr.mxu0 0.0
    %730 = vmatpush1.msra.mxu0 0.0
    %731 = vmatprep.subr.mxu0 0.0
    %732 = vmatpush1.msra.mxu0 0.0
    %733 = vmatprep.subr.mxu0 0.0
    %734 = vmatpush1.msra.mxu0 0.0
    %735 = vmatprep.subr.mxu0 0.0
    %736 = vmatpush1.msra.mxu0 0.0
    %737 = vmatprep.subr.mxu0 0.0
    %738 = vmatpush1.msra.mxu0 0.0
    %739 = vmatprep.subr.mxu0 0.0
    %740 = vmatpush1.msra.mxu0 0.0
    %741 = vmatprep.subr.mxu0 0.0
    %742 = vmatpush1.msra.mxu0 0.0
    %743 = vmatprep.subr.mxu0 0.0
    %744 = vmatpush1.msra.mxu0 0.0
    %745 = vmatprep.subr.mxu0 0.0
    %746 = vmatpush1.msra.mxu0 0.0
    %747 = vmatprep.subr.mxu0 0.0
    %748 = vmatpush1.msra.mxu0 0.0
    %749 = vmatprep.subr.mxu0 0.0
    %750 = vmatpush1.msra.mxu0 0.0
    %751 = vmatprep.subr.mxu0 0.0
    %752 = vmatpush1.msra.mxu0 0.0
    %753 = vmatprep.subr.mxu0 0.0
    %754 = vmatpush1.msra.mxu0 0.0
    %755 = vmatprep.subr.mxu0 0.0
    %756 = vmatpush1.msra.mxu0 0.0
    %757 = vmatprep.subr.mxu0 0.0
    %758 = vmatpush1.msra.mxu0 0.0
    %759 = vmatprep.subr.mxu0 0.0
    %760 = vmatpush1.msra.mxu0 0.0
    %761 = vmatprep.subr.mxu0 0.0
    %762 = vmatpush1.msra.mxu0 0.0
    %763 = vmatprep.subr.mxu0 0.0
    %764 = vmatpush1.msra.mxu0 0.0
    %765 = vmatprep.subr.mxu0 0.0
    %766 = vmatpush1.msra.mxu0 0.0
    %767 = vmatprep.subr.mxu0 0.0
    %768 = vmatpush1.msra.mxu0 0.0
    %769 = vmatprep.subr.mxu0 0.0
    %770 = vmatpush1.msra.mxu0 0.0
    %771 = vmatprep.subr.mxu0 0.0
    %772 = vmatpush1.msra.mxu0 0.0
    %773 = vmatprep.subr.mxu0 0.0
    %774 = vmatpush1.msra.mxu0 0.0
    %775 = vmatprep.subr.mxu0 0.0
    %776 = vmatpush1.msra.mxu0 0.0
    %777 = vmatprep.subr.mxu0 0.0
    %778 = vmatpush1.msra.mxu0 0.0
    %779 = vmatprep.subr.mxu0 0.0
    %780 = vmatpush1.msra.mxu0 0.0
    %781 = vmatprep.subr.mxu0 0.0
    %782 = vmatpush1.msra.mxu0 0.0
    %783 = vmatprep.subr.mxu0 0.0
    %784 = vmatpush1.msra.mxu0 0.0
    %785 = vmatprep.mubr.f32.mxu0 0.0
    %786 = vmatmul.mubr.f32.gmra.mrb[0].mxu0 %v716
    %v787 = vpop.f32.mrb[0].mxu0
    %v788 = vadd.f32 %v713, %v787
    %v789 = vpop.f32.mrb[0].mxu0
    %790 = vdwg.mxu0
    %v791 = vld [vmem:[%s23] sm:$0x1]
    %v793 = vlaneseq
    %v794 = vshrl.u32 %v793, 7
    %v795 = vsub.s32 0, %v794
    %v796 = vrot.slane %v791, %v795
    %v798 = vmul.f32 %v788, %v796
    %v799 = vtanh.pop %v798
    %801 = vrot.lane.b32.xlu0 %v798, 112
    %v802 = vpop.permute.xlu0 %801
    %v804 = vadd.f32 %v458, %v802
    %v805 = vmul.f32 %v799, 1.442695
    %v806 = vpow.pop %v805
    %v807 = vmul.f32 %v804, %v806
    %808 = vst.msk [vmem:[#allocation5] sm:$0xff] %vm111, %v807
    %vm809 = vcmask 261248
    %810 = vst.msk [vmem:[#allocation5] sm:$0xff] %vm809, %v456
    %v811 = vsel %vm111, %v444, 0.0
    %812 = vadd.xlane.f32.xlu0 %v811
    %v813 = vpop.xlane.xlu0 %812
    %v814 = vsel %vm111, %v799, 0.0
    %815 = vadd.xlane.f32.xlu0 %v814
    %v816 = vpop.xlane.xlu0 %815
    %v817 = vadd.f32 %v813, %v816
    %vm818 = vcmask 7168
    %819 = vst.msk [vmem:[%s25] sm:$0xff] %vm818, %v817
    // Predicated region
    $region102: #{flow_forward.1} parent=1 // pred_check
      _
    $region103: #{flow_forward.1} parent=1 // pred_check_branch
      %821 = sbr.rel (0) target = $region105
    $region104: #{flow_forward.1} parent=1 // pred_region
      %s823 = ssub.s32 128, 128
      %824 = vsyncadd [#allocation3], %s823
      %s826 = sshll.u32 [#allocation5], 4
      %s827 = int_to_ptr.vmem [resolvable:$true] %s826
      %829 = dma.vmem_to_hbm [thread:$0]  %s827, 128, %s24, [#allocation3]
    $region105: #{flow_forward.1} parent=1 // pred_fallthru
      _
    // Predicated region
    $region106: #{flow_forward.1} parent=1 // pred_check
      _
    $region107: #{flow_forward.1} parent=1 // pred_check_branch
      %831 = sbr.rel (0) target = $region109
    $region108: #{flow_forward.1} parent=1 // pred_region
      _
    $region109: #{flow_forward.1} parent=1 // pred_fallthru
      _
    // Predicated region
    $region110: #{flow_forward.1} parent=1 // pred_check
      _
    $region111: #{flow_forward.1} parent=1 // pred_check_branch
      %833 = sbr.rel (0) target = $region113
    $region112: #{flow_forward.1} parent=1 // pred_region
      %834 = dma.done [#allocation3], 128
    $region113: #{flow_forward.1} parent=1 // pred_fallthru
      _
    // Predicated region
    $region114: #{flow_forward.1} parent=1 // pred_check
      _
    $region115: #{flow_forward.1} parent=1 // pred_check_branch
      %836 = sbr.rel (0) target = $region117
    $region116: #{flow_forward.1} parent=1 // pred_region
      _
    $region117: #{flow_forward.1} parent=1 // pred_fallthru
      _
    %837 = vsyncpa [#allocation3], 1
    %838 = vsyncpa [#allocation4], 1

</llo_original>
